<compile_context>
chip_gen: v7x
topology: tpu7x:2x2x1
jax: 0.10.0
libtpu: 0.0.40
codegen_flags: <defaults>
</compile_context>

<pallas_src>
import functools

import jax
import jax.numpy as jnp
from jax.experimental import pallas as pl
from jax.experimental.pallas import tpu as pltpu

LANE = 128      # TPU lane width
SUBLANE = 8     # f32 sublane count


def mlp_kernel(x_ref, w1_ref, b1_ref, w2_ref, b2_ref, o_ref):
    x = x_ref[...]                                   # (Bp, IN)
    if x.shape[1] == 1:
        # fc1 with K=1 is an outer product: keep it on the VPU.
        h = x * w1_ref[...] + b1_ref[...]            # (Bp,1)*(1,Hp) -> (Bp,Hp)
    else:
        h = jnp.dot(x, w1_ref[...],
                    preferred_element_type=jnp.float32) + b1_ref[...]
    h = jnp.maximum(h, 0.0)                          # ReLU (VPU)
    # fc2: one lane-dense MXU tile (Bp, Hp) @ (Hp, Op)
    o = jnp.dot(h, w2_ref[...],
                preferred_element_type=jnp.float32) + b2_ref[...]
    o_ref[...] = o.astype(o_ref.dtype)


def _round_up(n, m):
    return (n + m - 1) // m * m


@functools.partial(jax.jit)
def mymodel_forward(x, w1, b1, w2, b2):
    """x: (B, IN); w1: (IN, H); b1: (1, H); w2: (H, OUT); b2: (1, OUT)."""
    B, IN = x.shape
    H = w1.shape[1]
    OUT = w2.shape[1]

    # Lane-dense / sublane-aligned padded shapes.
    Bp = _round_up(B, SUBLANE)
    Hp = _round_up(H, LANE)
    Op = _round_up(OUT, LANE)

    xp = jnp.pad(x, ((0, Bp - B), (0, 0)))
    w1p = jnp.pad(w1, ((0, 0), (0, Hp - H)))
    b1p = jnp.pad(b1, ((0, 0), (0, Hp - H)))
    w2p = jnp.pad(w2, ((0, Hp - H), (0, Op - OUT)))
    b2p = jnp.pad(b2, ((0, 0), (0, Op - OUT)))

    vmem_spec = pl.BlockSpec(memory_space=pltpu.MemorySpace.VMEM)

    out_padded = pl.pallas_call(
        mlp_kernel,
        out_shape=jax.ShapeDtypeStruct((Bp, Op), x.dtype),
        in_specs=[vmem_spec] * 5,
        out_specs=vmem_spec,
    )(xp, w1p, b1p, w2p, b2p)

    return out_padded[:B, :OUT]


def reference_forward(x, w1, b1, w2, b2):
    h = jnp.maximum(x @ w1 + b1, 0.0)
    return h @ w2 + b2


if __name__ == "__main__":
    # Module hyperparameters (from MyModel.__init__ defaults).
    input_shape, hidden_units, output_shape = 1, 10, 10
    batch = 8

    key = jax.random.PRNGKey(0)
    kx, kw1, kb1, kw2, kb2 = jax.random.split(key, 5)

    # Deterministic synthetic params (mimics nn.Linear uniform init range).
    x = jax.random.normal(kx, (batch, input_shape), dtype=jnp.float32)
    lim1 = 1.0 / (input_shape ** 0.5)
    w1 = jax.random.uniform(kw1, (input_shape, hidden_units),
                            minval=-lim1, maxval=lim1, dtype=jnp.float32)
    b1 = jax.random.uniform(kb1, (1, hidden_units),
                            minval=-lim1, maxval=lim1, dtype=jnp.float32)
    lim2 = 1.0 / (hidden_units ** 0.5)
    w2 = jax.random.uniform(kw2, (hidden_units, output_shape),
                            minval=-lim2, maxval=lim2, dtype=jnp.float32)
    b2 = jax.random.uniform(kb2, (1, output_shape),
                            minval=-lim2, maxval=lim2, dtype=jnp.float32)

    out = mymodel_forward(x, w1, b1, w2, b2)
    out = jax.block_until_ready(out)

    ref = reference_forward(x, w1, b1, w2, b2)
    assert out.shape == (batch, output_shape)
    assert jnp.allclose(out, ref, atol=1e-5, rtol=1e-5), "mismatch vs reference"

    print("KERNEL_OK")
</pallas_src>

<mosaic_0001>
module attributes {stable_mosaic.version = 11 : i64} {
  func.func @mlp_kernel(%arg0: memref<8x1xf32, #tpu.memory_space<vmem>>, %arg1: memref<1x128xf32, #tpu.memory_space<vmem>>, %arg2: memref<1x128xf32, #tpu.memory_space<vmem>>, %arg3: memref<128x128xf32, #tpu.memory_space<vmem>>, %arg4: memref<1x128xf32, #tpu.memory_space<vmem>>, %arg5: memref<8x128xf32, #tpu.memory_space<vmem>>) attributes {dimension_semantics = [], scalar_prefetch = 0 : i64, scratch_operands = 0 : i64, tpu.core_type = #tpu.core_type<tc>} {
    %c0 = arith.constant 0 : index
    %c0_0 = arith.constant 0 : index
    %0 = vector.load %arg0[%c0, %c0_0] : memref<8x1xf32, #tpu.memory_space<vmem>>, vector<8x1xf32>
    %c0_1 = arith.constant 0 : index
    %c0_2 = arith.constant 0 : index
    %1 = vector.load %arg1[%c0_1, %c0_2] : memref<1x128xf32, #tpu.memory_space<vmem>>, vector<1x128xf32>
    %2 = vector.broadcast %0 : vector<8x1xf32> to vector<8x128xf32>
    %3 = vector.broadcast %1 : vector<1x128xf32> to vector<8x128xf32>
    %4 = arith.mulf %2, %3 : vector<8x128xf32>
    %c0_3 = arith.constant 0 : index
    %c0_4 = arith.constant 0 : index
    %5 = vector.load %arg2[%c0_3, %c0_4] : memref<1x128xf32, #tpu.memory_space<vmem>>, vector<1x128xf32>
    %6 = vector.broadcast %5 : vector<1x128xf32> to vector<8x128xf32>
    %7 = arith.addf %4, %6 : vector<8x128xf32>
    %cst = arith.constant 0.000000e+00 : f32
    %8 = vector.broadcast %cst : f32 to vector<8x128xf32>
    %9 = arith.maximumf %7, %8 : vector<8x128xf32>
    %c0_5 = arith.constant 0 : index
    %c0_6 = arith.constant 0 : index
    %10 = vector.load %arg3[%c0_5, %c0_6] : memref<128x128xf32, #tpu.memory_space<vmem>>, vector<128x128xf32>
    %cst_7 = arith.constant dense<0.000000e+00> : vector<8x128xf32>
    %11 = tpu.matmul %9, %10, %cst_7 {dimension_numbers = #tpu.dot_dimension_numbers<[1], [0], [0], [1], [0, 0, 1, 1], [], []>} : vector<8x128xf32>, vector<128x128xf32>, vector<8x128xf32> -> vector<8x128xf32>
    %c0_8 = arith.constant 0 : index
    %c0_9 = arith.constant 0 : index
    %12 = vector.load %arg4[%c0_8, %c0_9] : memref<1x128xf32, #tpu.memory_space<vmem>>, vector<1x128xf32>
    %13 = vector.broadcast %12 : vector<1x128xf32> to vector<8x128xf32>
    %14 = arith.addf %11, %13 : vector<8x128xf32>
    %c0_10 = arith.constant 0 : index
    %c0_11 = arith.constant 0 : index
    %15 = vector.load %arg5[%c0_10, %c0_11] : memref<8x128xf32, #tpu.memory_space<vmem>>, vector<8x128xf32>
    tpu.vector_store %arg5[%c0_10, %c0_11], %14 {strides = array<i32>} : memref<8x128xf32, #tpu.memory_space<vmem>>, vector<8x128xf32>,
    return
  }
}

</mosaic_0001>

<llo_original>
// kernel: mymodel_forward.1
$region0: #{mymodel_forward.1}
  #allocation0 [shape = 'u32[]', space=smem, size = 0x4, offset = 0x4, fixed_abs, tag = 'smem constant byte address 0x4 - core index']
  #allocation1 [shape = 'u32[144,128]{1,0:T(1,128)}', space=vmem, size = 0x12000, scoped, tag = 'internal scratch']
  %s0 = inlined_call_operand.vmem [shape: f32[8,1], index: 0, kind: input, shape index: {}]
  %s1 = inlined_call_operand.vmem [shape: f32[1,128], index: 1, kind: input, shape index: {}]
  %s2 = inlined_call_operand.vmem [shape: f32[1,128], index: 2, kind: input, shape index: {}]
  %s3 = inlined_call_operand.vmem [shape: f32[128,128], index: 3, kind: input, shape index: {}]
  %s4 = inlined_call_operand.vmem [shape: f32[1,128], index: 4, kind: input, shape index: {}]
  %s5 = inlined_call_operand.hbm [shape: f32[8,128], index: 5, kind: output, shape index: {}]
  %s6 = sld [smem:[#allocation0]]
  $region30: #{mymodel_forward.1} parent=0
    _
  %s8 = ssub.s32 1, %s6
  %s9 = scalar_select 0, %s8, %s6
  $region1: #{mymodel_forward.1} parent=0
    #allocation2 [shape = 'u8[4096]{0}', space=vmem, size = 0x1000, scoped, tag = 'output window, operand 0, single buffered']
    #allocation3 [shape = 's32[1]{0}', space=sflag, size = 0x4, scoped, tag = 'scoped memory for mymodel_forward.1']
    %10 = vsyncpa [#allocation3], 0
    // Predicated region
    $region2: #{mymodel_forward.1} parent=1 // pred_check
      _
    $region3: #{mymodel_forward.1} parent=1 // pred_check_branch
      %12 = sbr.rel (0) target = $region5
    $region4: #{mymodel_forward.1} parent=1 // pred_region
      _
    $region5: #{mymodel_forward.1} parent=1 // pred_fallthru
      _
    // Predicated region
    $region6: #{mymodel_forward.1} parent=1 // pred_check
      _
    $region7: #{mymodel_forward.1} parent=1 // pred_check_branch
      %14 = sbr.rel (0) target = $region9
    $region8: #{mymodel_forward.1} parent=1 // pred_region
      _
    $region9: #{mymodel_forward.1} parent=1 // pred_fallthru
      _
    // Predicated region
    $region10: #{mymodel_forward.1} parent=1 // pred_check
      _
    $region11: #{mymodel_forward.1} parent=1 // pred_check_branch
      %16 = sbr.rel (0) target = $region13
    $region12: #{mymodel_forward.1} parent=1 // pred_region
      _
    $region13: #{mymodel_forward.1} parent=1 // pred_fallthru
      _
    // Predicated region
    $region14: #{mymodel_forward.1} parent=1 // pred_check
      _
    $region15: #{mymodel_forward.1} parent=1 // pred_check_branch
      %18 = sbr.rel (0) target = $region17
    $region16: #{mymodel_forward.1} parent=1 // pred_region
      _
    $region17: #{mymodel_forward.1} parent=1 // pred_fallthru
      _
    // Predicated region
    $region18: #{mymodel_forward.1} parent=1 // pred_check
      _
    $region19: #{mymodel_forward.1} parent=1 // pred_check_branch
      %20 = sbr.rel (0) target = $region21
    $region20: #{mymodel_forward.1} parent=1 // pred_region
      _
    $region21: #{mymodel_forward.1} parent=1 // pred_fallthru
      _
    %v21 = vld [vmem:[%s0] sm:$0xff]
    %v22 = vld [vmem:[%s1] sm:$0x1]
    %24 = vset.pattern.permute.xlu0 0
    %25 = vperm.xlu0 %24, %v21
    %v26 = vpop.permute.xlu0 %25
    %v29 = vlaneseq
    %v30 = vshrl.u32 %v29, 7
    %v31 = vsub.s32 0, %v30
    %v32 = vrot.slane %v22, %v31
    %v34 = vmul.f32 %v26, %v32
    %v35 = vld [vmem:[%s2] sm:$0x1]
    %v37 = vlaneseq
    %v38 = vshrl.u32 %v37, 7
    %v39 = vsub.s32 0, %v38
    %v40 = vrot.slane %v35, %v39
    %v42 = vadd.f32 %v34, %v40
    %v43 = vmax.f32 %v42, 0.0
    %v44 = vld [vmem:[%s3] sm:$0xff]
    %v45 = vld [vmem:[%s3 + $0x8] sm:$0xff]
    %v46 = vld [vmem:[%s3 + $0x10] sm:$0xff]
    %v47 = vld [vmem:[%s3 + $0x18] sm:$0xff]
    %v48 = vld [vmem:[%s3 + $0x20] sm:$0xff]
    %v49 = vld [vmem:[%s3 + $0x28] sm:$0xff]
    %v50 = vld [vmem:[%s3 + $0x30] sm:$0xff]
    %v51 = vld [vmem:[%s3 + $0x38] sm:$0xff]
    %v52 = vld [vmem:[%s3 + $0x40] sm:$0xff]
    %v53 = vld [vmem:[%s3 + $0x48] sm:$0xff]
    %v54 = vld [vmem:[%s3 + $0x50] sm:$0xff]
    %v55 = vld [vmem:[%s3 + $0x58] sm:$0xff]
    %v56 = vld [vmem:[%s3 + $0x60] sm:$0xff]
    %v57 = vld [vmem:[%s3 + $0x68] sm:$0xff]
    %v58 = vld [vmem:[%s3 + $0x70] sm:$0xff]
    %v59 = vld [vmem:[%s3 + $0x78] sm:$0xff]
    %v60 = vld [vmem:[%s4] sm:$0x1]
    %v62 = vlaneseq
    %v63 = vshrl.u32 %v62, 7
    %v64 = vsub.s32 0, %v63
    %v65 = vrot.slane %v60, %v64
    %67 = vmatprep.subr.mxu0 0.0
    %68 = vmatpush1.msra.mxu0 %v44
    %69 = vmatprep.subr.mxu0 0.0
    %70 = vmatpush1.msra.mxu0 %v45
    %71 = vmatprep.subr.mxu0 0.0
    %72 = vmatpush1.msra.mxu0 %v46
    %73 = vmatprep.subr.mxu0 0.0
    %74 = vmatpush1.msra.mxu0 %v47
    %75 = vmatprep.subr.mxu0 0.0
    %76 = vmatpush1.msra.mxu0 %v48
    %77 = vmatprep.subr.mxu0 0.0
    %78 = vmatpush1.msra.mxu0 %v49
    %79 = vmatprep.subr.mxu0 0.0
    %80 = vmatpush1.msra.mxu0 %v50
    %81 = vmatprep.subr.mxu0 0.0
    %82 = vmatpush1.msra.mxu0 %v51
    %83 = vmatprep.subr.mxu0 0.0
    %84 = vmatpush1.msra.mxu0 %v52
    %85 = vmatprep.subr.mxu0 0.0
    %86 = vmatpush1.msra.mxu0 %v53
    %87 = vmatprep.subr.mxu0 0.0
    %88 = vmatpush1.msra.mxu0 %v54
    %89 = vmatprep.subr.mxu0 0.0
    %90 = vmatpush1.msra.mxu0 %v55
    %91 = vmatprep.subr.mxu0 0.0
    %92 = vmatpush1.msra.mxu0 %v56
    %93 = vmatprep.subr.mxu0 0.0
    %94 = vmatpush1.msra.mxu0 %v57
    %95 = vmatprep.subr.mxu0 0.0
    %96 = vmatpush1.msra.mxu0 %v58
    %97 = vmatprep.subr.mxu0 0.0
    %98 = vmatpush1.msra.mxu0 %v59
    %99 = vmatprep.subr.mxu0 0.0
    %100 = vmatpush1.msra.mxu0 0.0
    %101 = vmatprep.subr.mxu0 0.0
    %102 = vmatpush1.msra.mxu0 0.0
    %103 = vmatprep.subr.mxu0 0.0
    %104 = vmatpush1.msra.mxu0 0.0
    %105 = vmatprep.subr.mxu0 0.0
    %106 = vmatpush1.msra.mxu0 0.0
    %107 = vmatprep.subr.mxu0 0.0
    %108 = vmatpush1.msra.mxu0 0.0
    %109 = vmatprep.subr.mxu0 0.0
    %110 = vmatpush1.msra.mxu0 0.0
    %111 = vmatprep.subr.mxu0 0.0
    %112 = vmatpush1.msra.mxu0 0.0
    %113 = vmatprep.subr.mxu0 0.0
    %114 = vmatpush1.msra.mxu0 0.0
    %115 = vmatprep.subr.mxu0 0.0
    %116 = vmatpush1.msra.mxu0 0.0
    %117 = vmatprep.subr.mxu0 0.0
    %118 = vmatpush1.msra.mxu0 0.0
    %119 = vmatprep.subr.mxu0 0.0
    %120 = vmatpush1.msra.mxu0 0.0
    %121 = vmatprep.subr.mxu0 0.0
    %122 = vmatpush1.msra.mxu0 0.0
    %123 = vmatprep.subr.mxu0 0.0
    %124 = vmatpush1.msra.mxu0 0.0
    %125 = vmatprep.subr.mxu0 0.0
    %126 = vmatpush1.msra.mxu0 0.0
    %127 = vmatprep.subr.mxu0 0.0
    %128 = vmatpush1.msra.mxu0 0.0
    %129 = vmatprep.subr.mxu0 0.0
    %130 = vmatpush1.msra.mxu0 0.0
    %131 = vmatprep.mubr.f32.mxu0 0.0
    %132 = vmatmul.mubr.f32.gmra.mrb[0].mxu0 %v43
    %v133 = vpop.f32.mrb[0].mxu0
    %v134 = vadd.f32 %v65, %v133
    %v135 = vpop.f32.mrb[0].mxu0
    %136 = vdwg.mxu0
    %137 = vst [vmem:[#allocation2] sm:$0xff] %v134
    // Predicated region
    $region22: #{mymodel_forward.1} parent=1 // pred_check
      _
    $region23: #{mymodel_forward.1} parent=1 // pred_check_branch
      %139 = sbr.rel (0) target = $region25
    $region24: #{mymodel_forward.1} parent=1 // pred_region
      %s141 = ssub.s32 128, 128
      %142 = vsyncadd [#allocation3], %s141
      %s144 = sshll.u32 [#allocation2], 4
      %s145 = int_to_ptr.vmem [resolvable:$true] %s144
      %147 = dma.vmem_to_hbm [thread:$0]  %s145, 128, %s5, [#allocation3]
    $region25: #{mymodel_forward.1} parent=1 // pred_fallthru
      _
    // Predicated region
    $region26: #{mymodel_forward.1} parent=1 // pred_check
      _
    $region27: #{mymodel_forward.1} parent=1 // pred_check_branch
      %149 = sbr.rel (0) target = $region29
    $region28: #{mymodel_forward.1} parent=1 // pred_region
      %150 = dma.done [#allocation3], 128
    $region29: #{mymodel_forward.1} parent=1 // pred_fallthru
      _
    %151 = vsyncpa [#allocation3], 1

</llo_original>
